<compile_context>
chip_gen: v7x
topology: tpu7x:2x2x1
jax: 0.10.0
libtpu: 0.0.40
codegen_flags: <defaults>
</compile_context>

<pallas_src>
import math

import jax
import jax.numpy as jnp
from jax.experimental import pallas as pl
from jax.experimental.pallas import tpu as pltpu


_TM_TARGET = 512          # adjacency tile rows (multiple of 8)
_TN_TARGET = 1024         # adjacency tile cols (multiple of 128, lane-dense)
_VMEM_LIMIT = 32 * 1024 * 1024


def _round_up(x, m):
    return ((x + m - 1) // m) * m


# ---------------------------------------------------------------------------
# Kernels
# ---------------------------------------------------------------------------
def _projection_kernel(x_ref, w_ref, b_ref, o_ref):
    # [TR, F] @ [F, H] -> f32 accumulation on the MXU, f32 bias, cast on store.
    acc = jnp.dot(x_ref[...], w_ref[...], preferred_element_type=jnp.float32)
    o_ref[...] = (acc + b_ref[...]).astype(o_ref.dtype)


def _adjacency_kernel(out_ref, prev_ref, adj_ref):
    # [TM, H] x [TN, H], contracting dim 1 of both operands — no explicit .T,
    # the MXU handles the RHS-transposed contraction directly.
    logits = jax.lax.dot_general(
        out_ref[...], prev_ref[...],
        dimension_numbers=(((1,), (1,)), ((), ())),
        preferred_element_type=jnp.float32)
    adj_ref[...] = jax.nn.sigmoid(logits).astype(adj_ref.dtype)


# ---------------------------------------------------------------------------
# Wrappers
# ---------------------------------------------------------------------------
def _project(x, w, b, tile_rows, compute_dtype):
    """x: [R, F] (R a multiple of tile_rows), w: [F, H], b: [1, H].
    Returns (x @ w + b) as [R, H] in compute_dtype (f32 accumulation)."""
    r, f = x.shape
    h = w.shape[1]
    itemsize = jnp.dtype(compute_dtype).itemsize
    return pl.pallas_call(
        _projection_kernel,
        out_shape=jax.ShapeDtypeStruct((r, h), compute_dtype),
        grid_spec=pl.GridSpec(
            grid=(r // tile_rows,),
            in_specs=[
                pl.BlockSpec((tile_rows, f), lambda i: (i, 0)),
                pl.BlockSpec((f, h), lambda i: (0, 0)),   # W resident
                pl.BlockSpec((1, h), lambda i: (0, 0)),   # bias resident (f32)
            ],
            out_specs=pl.BlockSpec((tile_rows, h), lambda i: (i, 0)),
        ),
        compiler_params=pltpu.CompilerParams(
            dimension_semantics=("parallel",),
            vmem_limit_bytes=_VMEM_LIMIT),
        cost_estimate=pl.CostEstimate(
            flops=2 * r * f * h,
            transcendentals=0,
            bytes_accessed=(r * f + f * h + r * h) * itemsize + h * 4),
    )(x.astype(compute_dtype), w.astype(compute_dtype), b.astype(jnp.float32))


def _adjacency(out, out_prev, tm, tn, out_dtype):
    """out: [M, H], out_prev: [N, H] (M % tm == 0, N % tn == 0).
    Returns sigmoid(out @ out_prev.T) as [M, N] in out_dtype."""
    m, h = out.shape
    n = out_prev.shape[0]
    in_itemsize = out.dtype.itemsize
    out_itemsize = jnp.dtype(out_dtype).itemsize
    return pl.pallas_call(
        _adjacency_kernel,
        out_shape=jax.ShapeDtypeStruct((m, n), out_dtype),
        grid_spec=pl.GridSpec(
            grid=(m // tm, n // tn),
            in_specs=[
                pl.BlockSpec((tm, h), lambda i, j: (i, 0)),
                pl.BlockSpec((tn, h), lambda i, j: (j, 0)),
            ],
            out_specs=pl.BlockSpec((tm, tn), lambda i, j: (i, j)),
        ),
        compiler_params=pltpu.CompilerParams(
            dimension_semantics=("parallel", "parallel"),
            vmem_limit_bytes=_VMEM_LIMIT),
        cost_estimate=pl.CostEstimate(
            flops=2 * m * n * h,
            transcendentals=m * n,            # sigmoid exp
            bytes_accessed=(m * h + n * h) * in_itemsize + m * n * out_itemsize),
    )(out, out_prev)


def sage_decoder(encoded_features, previous_features, w1, b1, w2, b2,
                 *, compute_dtype=jnp.bfloat16, out_dtype=jnp.float32):
    """encoded_features: [N_enc, H]; previous_features: [N_prev, F].
    w1: [H, H] ([in, out]); w2: [F, H] ([in, out]); b1, b2: [1, H].
    Returns sigmoid adjacency [N_enc, N_prev] in out_dtype."""
    n_enc, _ = encoded_features.shape
    n_prev, _ = previous_features.shape

    # Lane-dense adjacency tiles: TM % 8 == 0, TN % 128 == 0.
    tm = min(_TM_TARGET, _round_up(n_enc, 8))
    tn = min(_TN_TARGET, _round_up(n_prev, 128))
    m_pad = _round_up(n_enc, tm)
    n_pad = _round_up(n_prev, tn)

    enc = encoded_features
    prev = previous_features
    if m_pad != n_enc:
        enc = jnp.pad(enc, ((0, m_pad - n_enc), (0, 0)))
    if n_pad != n_prev:
        prev = jnp.pad(prev, ((0, n_pad - n_prev), (0, 0)))

    # Stage 1: hoisted projections (each linear layer computed exactly once).
    out = _project(enc, w1, b1, tm, compute_dtype)        # [m_pad, H]
    out_prev = _project(prev, w2, b2, tn, compute_dtype)  # [n_pad, H]

    # Stage 2: tiled adjacency = sigmoid(out @ out_prev.T).
    adj = _adjacency(out, out_prev, tm, tn, out_dtype)    # [m_pad, n_pad]
    return adj[:n_enc, :n_prev]


# ---------------------------------------------------------------------------
# Parameter init mirroring the PyTorch module
# ---------------------------------------------------------------------------
def xavier_uniform(key, shape, gain):
    # PyTorch xavier_uniform_ on a Linear weight [out, in]:
    # bound = gain * sqrt(6 / (fan_in + fan_out))
    fan_out, fan_in = shape
    bound = gain * math.sqrt(6.0 / (fan_in + fan_out))
    return jax.random.uniform(key, shape, jnp.float32, -bound, bound)


def linear_bias_init(key, fan_in, out_features):
    # PyTorch nn.Linear default bias init: U(-1/sqrt(fan_in), 1/sqrt(fan_in))
    bound = 1.0 / math.sqrt(fan_in)
    return jax.random.uniform(key, (1, out_features), jnp.float32, -bound, bound)


if __name__ == "__main__":
    num_hidden = 32
    num_feats = 64
    n_enc = 16   # rows of encoded_features
    n_prev = 8   # rows of previous_features

    key = jax.random.PRNGKey(0)
    k_enc, k_prev, k_w1, k_b1, k_w2, k_b2 = jax.random.split(key, 6)

    encoded_features = jax.random.normal(k_enc, (n_enc, num_hidden), jnp.float32)
    previous_features = jax.random.normal(k_prev, (n_prev, num_feats), jnp.float32)

    gain_relu = math.sqrt(2.0)  # nn.init.calculate_gain('relu')
    # PyTorch stores Linear weights as [out, in]; transpose to [in, out].
    w1_pt = xavier_uniform(k_w1, (num_hidden, num_hidden), gain_relu)
    w2_pt = xavier_uniform(k_w2, (num_hidden, num_feats), gain_relu)
    w1 = w1_pt.T            # [H, H]
    w2 = w2_pt.T            # [F, H]
    b1 = linear_bias_init(k_b1, num_hidden, num_hidden)   # [1, H]
    b2 = linear_bias_init(k_b2, num_feats, num_hidden)    # [1, H]

    # Plain-JAX f32 reference.
    out_ref = encoded_features @ w1 + b1
    out_prev_ref = previous_features @ w2 + b2
    adj_ref = jax.nn.sigmoid(out_ref @ out_prev_ref.T)

    # f32 compute path: matches the PyTorch math tightly.
    adj_f32 = sage_decoder(encoded_features, previous_features, w1, b1, w2, b2,
                           compute_dtype=jnp.float32)
    adj_f32 = jax.block_until_ready(adj_f32)
    assert adj_f32.shape == (n_enc, n_prev)
    assert jnp.allclose(adj_f32, adj_ref, atol=1e-5, rtol=1e-5)

    # Default bf16-MXU path (f32 accumulation): relaxed tolerance.
    adj_bf16 = sage_decoder(encoded_features, previous_features, w1, b1, w2, b2)
    adj_bf16 = jax.block_until_ready(adj_bf16)
    assert adj_bf16.shape == (n_enc, n_prev)
    assert jnp.allclose(adj_bf16, adj_ref, atol=5e-2, rtol=5e-2)

    print("KERNEL_OK")
</pallas_src>

<mosaic_0001>
module attributes {stable_mosaic.version = 11 : i64} {
  func.func @_projection_kernel(%arg0: i32, %arg1: memref<16x32xf32, #tpu.memory_space<vmem>>, %arg2: memref<32x32xf32, #tpu.memory_space<vmem>>, %arg3: memref<1x32xf32, #tpu.memory_space<vmem>>, %arg4: memref<16x32xf32, #tpu.memory_space<vmem>>) attributes {dimension_semantics = [#tpu.dimension_semantics<parallel>], iteration_bounds = array<i64: 1>, scalar_prefetch = 0 : i64, scratch_operands = 0 : i64, tpu.core_type = #tpu.core_type<tc>, window_params = [{transform_indices = @transform_0, window_bounds = array<i64: 16, 32>}, {pipeline_mode = #tpu.pipeline_mode<synchronous>, transform_indices = @transform_1, window_bounds = array<i64: 32, 32>}, {pipeline_mode = #tpu.pipeline_mode<synchronous>, transform_indices = @transform_2, window_bounds = array<i64: 1, 32>}, {transform_indices = @transform_3, window_bounds = array<i64: 16, 32>}]} {
    %c0 = arith.constant 0 : index
    %c0_0 = arith.constant 0 : index
    %0 = vector.load %arg1[%c0, %c0_0] : memref<16x32xf32, #tpu.memory_space<vmem>>, vector<16x32xf32>
    %c0_1 = arith.constant 0 : index
    %c0_2 = arith.constant 0 : index
    %1 = vector.load %arg2[%c0_1, %c0_2] : memref<32x32xf32, #tpu.memory_space<vmem>>, vector<32x32xf32>
    %cst = arith.constant dense<0.000000e+00> : vector<16x32xf32>
    %2 = tpu.matmul %0, %1, %cst {dimension_numbers = #tpu.dot_dimension_numbers<[1], [0], [0], [1], [0, 0, 1, 1], [], []>} : vector<16x32xf32>, vector<32x32xf32>, vector<16x32xf32> -> vector<16x32xf32>
    %c0_3 = arith.constant 0 : index
    %c0_4 = arith.constant 0 : index
    %3 = vector.load %arg3[%c0_3, %c0_4] : memref<1x32xf32, #tpu.memory_space<vmem>>, vector<1x32xf32>
    %4 = vector.broadcast %3 : vector<1x32xf32> to vector<16x32xf32>
    %5 = arith.addf %2, %4 : vector<16x32xf32>
    %c0_5 = arith.constant 0 : index
    %c0_6 = arith.constant 0 : index
    %6 = vector.load %arg4[%c0_5, %c0_6] : memref<16x32xf32, #tpu.memory_space<vmem>>, vector<16x32xf32>
    tpu.vector_store %arg4[%c0_5, %c0_6], %5 {strides = array<i32>} : memref<16x32xf32, #tpu.memory_space<vmem>>, vector<16x32xf32>,
    return
  }
  func.func @transform_0(%arg0: i32) -> (i32, i32) {
    %c0_i32 = arith.constant 0 : i32
    %c0_i32_0 = arith.constant 0 : i32
    return %arg0, %c0_i32 : i32, i32
  }
  func.func @transform_1(%arg0: i32) -> (i32, i32) {
    %c0_i32 = arith.constant 0 : i32
    %c0_i32_0 = arith.constant 0 : i32
    %c0_i32_1 = arith.constant 0 : i32
    return %c0_i32, %c0_i32_0 : i32, i32
  }
  func.func @transform_2(%arg0: i32) -> (i32, i32) {
    %c0_i32 = arith.constant 0 : i32
    %c0_i32_0 = arith.constant 0 : i32
    %c0_i32_1 = arith.constant 0 : i32
    return %c0_i32, %c0_i32_0 : i32, i32
  }
  func.func @transform_3(%arg0: i32) -> (i32, i32) {
    %c0_i32 = arith.constant 0 : i32
    %c0_i32_0 = arith.constant 0 : i32
    return %arg0, %c0_i32 : i32, i32
  }
}

</mosaic_0001>

<llo_original>
// kernel: tpu_custom_call.1
$region0: #{tpu_custom_call.1}
  #allocation0 [shape = 'u32[]', space=smem, size = 0x4, offset = 0x4, fixed_abs, tag = 'smem constant byte address 0x4 - core index']
  #allocation1 [shape = 'u32[144,128]{1,0:T(1,128)}', space=vmem, size = 0x12000, scoped, tag = 'internal scratch']
  %s0 = inlined_call_operand.hbm [shape: f32[16,32], index: 0, kind: input, shape index: {}]
  %s1 = inlined_call_operand.hbm [shape: f32[32,32], index: 1, kind: input, shape index: {}]
  %s2 = inlined_call_operand.vmem [shape: f32[1,32], index: 2, kind: input, shape index: {}]
  %s3 = inlined_call_operand.hbm [shape: f32[16,32], index: 3, kind: output, shape index: {}]
  %s4 = sld [smem:[#allocation0]]
  $region30: #{tpu_custom_call.1} parent=0
    _
  %s6 = ssub.s32 1, %s4
  %s7 = scalar_select 0, %s6, %s4
  $region1: #{tpu_custom_call.1} parent=0
    #allocation2 [shape = 'u8[8192]{0}', space=vmem, size = 0x2000, scoped, tag = 'input window, operand 0, single buffered']
    #allocation3 [shape = 's32[1]{0}', space=sflag, size = 0x4, scoped, tag = 'scoped memory for tpu_custom_call.1']
    #allocation4 [shape = 's32[1]{0}', space=sflag, size = 0x4, scoped, tag = 'scoped memory for tpu_custom_call.1']
    #allocation5 [shape = 'u8[16384]{0}', space=vmem, size = 0x4000, scoped, tag = 'input window, operand 1, single buffered']
    #allocation6 [shape = 's32[1]{0}', space=sflag, size = 0x4, scoped, tag = 'scoped memory for tpu_custom_call.1']
    #allocation7 [shape = 'u8[8192]{0}', space=vmem, size = 0x2000, scoped, tag = 'output window, operand 0, single buffered']
    %8 = vsyncpa [#allocation3], 0
    %9 = vsyncpa [#allocation6], 0
    %10 = vsyncpa [#allocation4], 0
    // Predicated region
    $region2: #{tpu_custom_call.1} parent=1 // pred_check
      _
    $region3: #{tpu_custom_call.1} parent=1 // pred_check_branch
      %12 = sbr.rel (0) target = $region5
    $region4: #{tpu_custom_call.1} parent=1 // pred_region
      %s14 = ssub.s32 256, 256
      %15 = vsyncadd [#allocation3], %s14
      %s16 = sshll.u32 [#allocation2], 4
      %s17 = int_to_ptr.vmem [resolvable:$true] %s16
      %22 = dma.hbm_to_vmem [thread:$0]  %s0, 256, %s17, [#allocation3], 128, 128, 8
    $region5: #{tpu_custom_call.1} parent=1 // pred_fallthru
      _
    // Predicated region
    $region6: #{tpu_custom_call.1} parent=1 // pred_check
      _
    $region7: #{tpu_custom_call.1} parent=1 // pred_check_branch
      %24 = sbr.rel (0) target = $region9
    $region8: #{tpu_custom_call.1} parent=1 // pred_region
      %s26 = ssub.s32 512, 512
      %27 = vsyncadd [#allocation6], %s26
      %s28 = sshll.u32 [#allocation5], 4
      %s29 = int_to_ptr.vmem [resolvable:$true] %s28
      %34 = dma.hbm_to_vmem [thread:$0]  %s1, 512, %s29, [#allocation6], 128, 128, 8
    $region9: #{tpu_custom_call.1} parent=1 // pred_fallthru
      _
    // Predicated region
    $region10: #{tpu_custom_call.1} parent=1 // pred_check
      _
    $region11: #{tpu_custom_call.1} parent=1 // pred_check_branch
      %36 = sbr.rel (0) target = $region13
    $region12: #{tpu_custom_call.1} parent=1 // pred_region
      _
    $region13: #{tpu_custom_call.1} parent=1 // pred_fallthru
      _
    // Predicated region
    $region14: #{tpu_custom_call.1} parent=1 // pred_check
      _
    $region15: #{tpu_custom_call.1} parent=1 // pred_check_branch
      %38 = sbr.rel (0) target = $region17
    $region16: #{tpu_custom_call.1} parent=1 // pred_region
      %39 = dma.done [#allocation3], 256
    $region17: #{tpu_custom_call.1} parent=1 // pred_fallthru
      _
    // Predicated region
    $region18: #{tpu_custom_call.1} parent=1 // pred_check
      _
    $region19: #{tpu_custom_call.1} parent=1 // pred_check_branch
      %41 = sbr.rel (0) target = $region21
    $region20: #{tpu_custom_call.1} parent=1 // pred_region
      %42 = dma.done [#allocation6], 512
    $region21: #{tpu_custom_call.1} parent=1 // pred_fallthru
      _
    %v43 = vld [vmem:[#allocation2] sm:$0xff]
    %v44 = vld [vmem:[#allocation2 + $0x8] sm:$0xff]
    %v45 = vld [vmem:[#allocation5] sm:$0xff]
    %v46 = vld [vmem:[#allocation5 + $0x8] sm:$0xff]
    %v47 = vld [vmem:[#allocation5 + $0x10] sm:$0xff]
    %v48 = vld [vmem:[#allocation5 + $0x18] sm:$0xff]
    %v49 = vld [vmem:[%s2] sm:$0x1]
    %v51 = vlaneseq
    %v52 = vshrl.u32 %v51, 7
    %v53 = vsub.s32 0, %v52
    %v54 = vrot.slane %v49, %v53
    %vm56 = vcmask 261120
    %v58 = vsel %vm56, %v43, 0
    %v61 = vsel %vm56, %v44, 0
    %63 = vmatprep.subr.mxu0 0.0
    %64 = vmatpush1.msra.mxu0 %v45
    %65 = vmatprep.subr.mxu0 0.0
    %66 = vmatpush1.msra.mxu0 %v46
    %67 = vmatprep.subr.mxu0 0.0
    %68 = vmatpush1.msra.mxu0 %v47
    %69 = vmatprep.subr.mxu0 0.0
    %70 = vmatpush1.msra.mxu0 %v48
    %71 = vmatprep.subr.mxu0 0.0
    %72 = vmatpush1.msra.mxu0 0.0
    %73 = vmatprep.subr.mxu0 0.0
    %74 = vmatpush1.msra.mxu0 0.0
    %75 = vmatprep.subr.mxu0 0.0
    %76 = vmatpush1.msra.mxu0 0.0
    %77 = vmatprep.subr.mxu0 0.0
    %78 = vmatpush1.msra.mxu0 0.0
    %79 = vmatprep.subr.mxu0 0.0
    %80 = vmatpush1.msra.mxu0 0.0
    %81 = vmatprep.subr.mxu0 0.0
    %82 = vmatpush1.msra.mxu0 0.0
    %83 = vmatprep.subr.mxu0 0.0
    %84 = vmatpush1.msra.mxu0 0.0
    %85 = vmatprep.subr.mxu0 0.0
    %86 = vmatpush1.msra.mxu0 0.0
    %87 = vmatprep.subr.mxu0 0.0
    %88 = vmatpush1.msra.mxu0 0.0
    %89 = vmatprep.subr.mxu0 0.0
    %90 = vmatpush1.msra.mxu0 0.0
    %91 = vmatprep.subr.mxu0 0.0
    %92 = vmatpush1.msra.mxu0 0.0
    %93 = vmatprep.subr.mxu0 0.0
    %94 = vmatpush1.msra.mxu0 0.0
    %95 = vmatprep.subr.mxu0 0.0
    %96 = vmatpush1.msra.mxu0 0.0
    %97 = vmatprep.subr.mxu0 0.0
    %98 = vmatpush1.msra.mxu0 0.0
    %99 = vmatprep.subr.mxu0 0.0
    %100 = vmatpush1.msra.mxu0 0.0
    %101 = vmatprep.subr.mxu0 0.0
    %102 = vmatpush1.msra.mxu0 0.0
    %103 = vmatprep.subr.mxu0 0.0
    %104 = vmatpush1.msra.mxu0 0.0
    %105 = vmatprep.subr.mxu0 0.0
    %106 = vmatpush1.msra.mxu0 0.0
    %107 = vmatprep.subr.mxu0 0.0
    %108 = vmatpush1.msra.mxu0 0.0
    %109 = vmatprep.subr.mxu0 0.0
    %110 = vmatpush1.msra.mxu0 0.0
    %111 = vmatprep.subr.mxu0 0.0
    %112 = vmatpush1.msra.mxu0 0.0
    %113 = vmatprep.subr.mxu0 0.0
    %114 = vmatpush1.msra.mxu0 0.0
    %115 = vmatprep.subr.mxu0 0.0
    %116 = vmatpush1.msra.mxu0 0.0
    %117 = vmatprep.subr.mxu0 0.0
    %118 = vmatpush1.msra.mxu0 0.0
    %119 = vmatprep.subr.mxu0 0.0
    %120 = vmatpush1.msra.mxu0 0.0
    %121 = vmatprep.subr.mxu0 0.0
    %122 = vmatpush1.msra.mxu0 0.0
    %123 = vmatprep.subr.mxu0 0.0
    %124 = vmatpush1.msra.mxu0 0.0
    %125 = vmatprep.subr.mxu0 0.0
    %126 = vmatpush1.msra.mxu0 0.0
    %127 = vmatprep.mubr.f32.mxu0 0.0
    %128 = vmatmul.mubr.f32.gmra.mrb[0].mxu0 %v58
    %v129 = vpop.f32.mrb[0].mxu0
    %v130 = vadd.f32 %v54, %v129
    %v131 = vpop.f32.mrb[0].mxu0
    %132 = vmatprep.mubr.f32.mxu0 0.0
    %133 = vmatmul.mubr.f32.gmra.mrb[0].mxu0 %v61
    %v134 = vpop.f32.mrb[0].mxu0
    %v135 = vadd.f32 %v54, %v134
    %v136 = vpop.f32.mrb[0].mxu0
    %137 = vdwg.mxu0
    %138 = vst.msk [vmem:[#allocation7] sm:$0xff] %vm56, %v130
    %139 = vst.msk [vmem:[#allocation7 + $0x8] sm:$0xff] %vm56, %v135
    // Predicated region
    $region22: #{tpu_custom_call.1} parent=1 // pred_check
      _
    $region23: #{tpu_custom_call.1} parent=1 // pred_check_branch
      %141 = sbr.rel (0) target = $region25
    $region24: #{tpu_custom_call.1} parent=1 // pred_region
      %s143 = ssub.s32 256, 256
      %144 = vsyncadd [#allocation4], %s143
      %s145 = sshll.u32 [#allocation7], 4
      %s146 = int_to_ptr.vmem [resolvable:$true] %s145
      %151 = dma.vmem_to_hbm [thread:$0]  %s146, 256, %s3, [#allocation4], 128, 128, 8
    $region25: #{tpu_custom_call.1} parent=1 // pred_fallthru
      _
    // Predicated region
    $region26: #{tpu_custom_call.1} parent=1 // pred_check
      _
    $region27: #{tpu_custom_call.1} parent=1 // pred_check_branch
      %153 = sbr.rel (0) target = $region29
    $region28: #{tpu_custom_call.1} parent=1 // pred_region
      %154 = dma.done [#allocation4], 256
    $region29: #{tpu_custom_call.1} parent=1 // pred_fallthru
      _
    %155 = vsyncpa [#allocation3], 1
    %156 = vsyncpa [#allocation6], 1
    %157 = vsyncpa [#allocation4], 1

</llo_original>
